<compile_context>
chip_gen: v7x
topology: tpu7x:2x2x1
jax: 0.10.0
libtpu: 0.0.40
codegen_flags: <defaults>
</compile_context>

<pallas_src>
from functools import partial

import numpy as np
import jax
import jax.numpy as jnp
from jax.experimental import pallas as pl
from jax.experimental.pallas import tpu as pltpu


def _round_up(a, m):
    return (a + m - 1) // m * m


# --------------------------------------------------------------------------
# Host-side glue: build the (real) SimplifiedTwoDesign unitary from RY / CZ.
# --------------------------------------------------------------------------
def _ry(theta):
    c, s = np.cos(theta / 2.0), np.sin(theta / 2.0)
    return np.array([[c, -s], [s, c]], dtype=np.float64)


_CZ = np.diag([1.0, 1.0, 1.0, -1.0]).astype(np.float64)


def _expand_1q(g, wire, q):
    return np.kron(np.kron(np.eye(2**wire), g), np.eye(2 ** (q - wire - 1)))


def _expand_2q(g4, wire, q):
    return np.kron(np.kron(np.eye(2**wire), g4), np.eye(2 ** (q - wire - 2)))


def build_simplified_two_design_unitary(bias, weights, n_qubits):
    """PennyLane SimplifiedTwoDesign(bias, weights) as a dense real matrix."""
    U = np.eye(2**n_qubits)
    for w in range(n_qubits):  # initial RY layer
        U = _expand_1q(_ry(bias[w]), w, n_qubits) @ U
    even_pairs = list(range(0, n_qubits - 1, 2))
    odd_pairs = list(range(1, n_qubits - 1, 2))
    for layer in range(weights.shape[0]):
        idx = 0
        for w in even_pairs + odd_pairs:          # even entanglers then odd
            U = _expand_2q(_CZ, w, n_qubits) @ U
            U = _expand_1q(_ry(weights[layer, idx, 0]), w, n_qubits) @ U
            U = _expand_1q(_ry(weights[layer, idx, 1]), w + 1, n_qubits) @ U
            idx += 1
    return U


class Quanv2dParams:
    """Deterministic parameter setup mirroring Quanv2d.__init__ / QNN.__init__."""

    def __init__(self, in_channels, out_channels, kernel_size=1, stride=1,
                 nlayer=2, key=None):
        self.in_channels = in_channels
        self.out_channels = out_channels
        self.kernel_size = kernel_size
        self.stride = stride
        self.in_features = in_channels * kernel_size**2

        isize = int(np.ceil(np.log2(self.in_features)))   # emb == 'amp'
        osize = int(np.ceil(np.log2(out_channels)))       # meas == 'probs'
        self.n_qubits = int(max(isize, osize, 1))
        self.dim = 2**self.n_qubits                        # state-vector length

        # TorchLayer default init: uniform(0, 2*pi)
        kb, kw = jax.random.split(key)
        bias = np.asarray(
            jax.random.uniform(kb, (self.n_qubits,), minval=0.0,
                               maxval=2.0 * np.pi), np.float64)
        weights = np.asarray(
            jax.random.uniform(kw, (nlayer, self.n_qubits - 1, 2), minval=0.0,
                               maxval=2.0 * np.pi), np.float64)

        U = build_simplified_two_design_unitary(bias, weights, self.n_qubits)
        self.u_full = jnp.asarray(U, jnp.float32)

        # probs[..., -out_channels:]  <=>  keep the last out_channels rows of U
        F, O, D = self.in_features, out_channels, self.dim
        u_out = U[D - O:, :]
        self.u_f = jnp.asarray(u_out[:, :F], jnp.float32)          # (O, F)
        self.b_col = jnp.asarray(u_out[:, F:D].sum(axis=1,
                                                   keepdims=True),
                                 jnp.float32)                      # (O, 1)
        self.pad_count = float(D - F)   # number of pad-with-1 amplitudes


# --------------------------------------------------------------------------
# Pallas kernel: fold pad-with-1 + normalization into scalar terms, apply U,
# square -> probabilities.
# --------------------------------------------------------------------------
def _quanv_kernel(x_ref, u_ref, b_ref, o_ref, *, pad_count):
    x = x_ref[...].astype(jnp.float32)                         # (F, TN) raw patches
    # AmplitudeEmbedding(pad_with=1, normalize=True):
    #   ||[x, 1, ..., 1]||^2 = sum(x^2) + (dim - F)
    s = jnp.sum(x * x, axis=0, keepdims=True) + pad_count      # (1, TN)  (XLU slot)
    # Guard: only bites for exactly-zero patches / garbage boundary lanes.
    s = jnp.maximum(s, jnp.float32(1e-30))
    # MXU: tiny contraction lands in the otherwise-idle vector-extended slot.
    y = jnp.dot(u_ref[...], x, preferred_element_type=jnp.float32)  # (O, TN)
    y = y + b_ref[...]                                         # ones-columns of U
    # U orthogonal => probs = (U @ [x,1..1])^2 / ||[x,1..1]||^2
    o_ref[...] = (y * y) * pl.reciprocal(s, approx=True)       # EUP slot


# --------------------------------------------------------------------------
# Wrapper (pad + unfold glue around the kernel).
# --------------------------------------------------------------------------
def _target_tn():
    # v7x is the most per-grid-step-overhead sensitive (3.2 TB/s HBM) -> 32K;
    # v6e/v5e amortize fine at 16K.
    try:
        kind = jax.devices()[0].device_kind.lower()
    except Exception:
        kind = ""
    return 32768 if "v7" in kind else 16384


def _pick_tn(L, F, O):
    """Lane tile: as big as possible, capped by a ~24 MB double-buffered budget."""
    budget = 24 << 20                               # bytes for 2x (in + out) f32 tiles
    by_vmem = budget // (8 * (F + O))               # 2 (dbl-buf) * 4 (f32 bytes)
    cap = max(128, (int(by_vmem) // 128) * 128)
    target = min(_target_tn(), cap)
    if L <= target:
        return L        # block == full lane extent -> always legal, zero padding
    return target       # multiple of 128; ragged last block handled by Pallas


def _im2col(x, k, s):
    """torch.nn.functional.unfold on the already-padded input (NCHW)."""
    B, C, Hp, Wp = x.shape
    Ho = (Hp - k) // s + 1
    Wo = (Wp - k) // s + 1
    patches = jnp.stack(
        [jnp.stack([x[:, :, i:i + (Ho - 1) * s + 1:s, j:j + (Wo - 1) * s + 1:s]
                    for j in range(k)], axis=2) for i in range(k)], axis=2)
    # (B, C, k, k, Ho, Wo) -> (B, C*k*k, Ho*Wo) matches unfold ordering (c, ki, kj)
    return patches.reshape(B, C * k * k, Ho * Wo), Ho, Wo


def quanv2d_forward(params, x):
    B, C, H, W = x.shape
    k, s = params.kernel_size, params.stride

    if k == 1 and s == 1:
        # Fast path: a 1x1 patch is just the channel vector, and NCHW is
        # already feature-major per batch -> no im2col / transpose / cast.
        Ho, Wo = H, W
        slab = x.reshape(B, C, H * W)                          # (B, F, L), source dtype
    else:
        pad_l, pad_r = (k - 1) // 2, k // 2
        xp = jnp.pad(x, ((0, 0), (0, 0), (pad_l, pad_r), (pad_l, pad_r)))
        slab, Ho, Wo = _im2col(xp, k, s)                       # (B, F, L), source dtype
        # TODO(synk): for k>1, fuse im2col into the kernel (halo BlockSpec or
        # pl.ANY + manual DMA of the padded NCHW input, accumulating over
        # (ki,kj) shifts) to avoid materializing the k^2-inflated slab.

    F = slab.shape[1]
    O = params.out_channels
    L = Ho * Wo
    tn = _pick_tn(L, F, O)
    n_steps = int(pl.cdiv(L, tn))

    # Raise the scoped-VMEM limit well above the double-buffered tile footprint
    # (the v5e default is only 16 MiB); stay under v7x's 64 MiB physical.
    tile_bytes = 4 * tn * (F + O)
    vmem_limit = int(min(max(4 * tile_bytes + (4 << 20), 32 << 20), 56 << 20))

    kernel = partial(_quanv_kernel, pad_count=params.pad_count)

    out = pl.pallas_call(
        kernel,
        out_shape=jax.ShapeDtypeStruct((B, O, L), jnp.float32),
        grid_spec=pltpu.PrefetchScalarGridSpec(
            num_scalar_prefetch=0,
            grid=(B, n_steps),
            in_specs=[
                pl.BlockSpec((None, F, tn), lambda b, n: (b, 0, n)),  # patches
                pl.BlockSpec((O, F), lambda b, n: (0, 0)),            # U rows (resident)
                pl.BlockSpec((O, 1), lambda b, n: (0, 0)),            # ones-fold bias
            ],
            out_specs=pl.BlockSpec((None, O, tn), lambda b, n: (b, 0, n)),
        ),
        compiler_params=pltpu.CompilerParams(
            dimension_semantics=("parallel", "parallel"),
            vmem_limit_bytes=vmem_limit),
    )(slab, params.u_f, params.b_col)

    return out.reshape(B, O, Ho, Wo)


# --------------------------------------------------------------------------
# Pure-JAX reference (mirrors the PyTorch / PennyLane semantics).
# --------------------------------------------------------------------------
def quanv2d_reference(params, x):
    B, C, H, W = x.shape
    k, s = params.kernel_size, params.stride
    pad_l, pad_r = (k - 1) // 2, k // 2
    xp = jnp.pad(x, ((0, 0), (0, 0), (pad_l, pad_r), (pad_l, pad_r)))
    patches, Ho, Wo = _im2col(xp, k, s)                     # (B, F, L)
    v = patches.transpose(0, 2, 1).astype(jnp.float32)      # (B, L, F)
    F = v.shape[-1]
    if params.dim > F:
        v = jnp.concatenate(
            [v, jnp.ones(v.shape[:-1] + (params.dim - F,), jnp.float32)], axis=-1)
    v = v / jnp.linalg.norm(v, axis=-1, keepdims=True)
    probs = jnp.einsum("blf,of->blo", v, params.u_full) ** 2
    out = probs[..., -params.out_channels:]                 # (B, L, O)
    return out.transpose(0, 2, 1).reshape(B, params.out_channels, Ho, Wo)


if __name__ == "__main__":
    key = jax.random.PRNGKey(0)
    kx, kp = jax.random.split(key)

    B, C, H, W = 2, 4, 16, 16
    out_channels = 4
    params = Quanv2dParams(C, out_channels, kernel_size=1, stride=1,
                           nlayer=2, key=kp)

    x = jax.random.uniform(kx, (B, C, H, W), jnp.float32, minval=0.1, maxval=1.0)

    y = quanv2d_forward(params, x)
    y = jax.block_until_ready(y)
    assert y.shape == (B, out_channels, H, W), y.shape

    y_ref = quanv2d_reference(params, x)
    # approx reciprocal in the kernel -> slightly looser tolerance than exact f32
    np.testing.assert_allclose(np.asarray(y), np.asarray(y_ref),
                               rtol=5e-3, atol=1e-5)

    print("KERNEL_OK")
</pallas_src>

<mosaic_0001>
module attributes {stable_mosaic.version = 11 : i64} {
  func.func @_quanv_kernel(%arg0: i32, %arg1: i32, %arg2: memref<1x4x256xf32, #tpu.memory_space<vmem>>, %arg3: memref<4x4xf32, #tpu.memory_space<vmem>>, %arg4: memref<4x1xf32, #tpu.memory_space<vmem>>, %arg5: memref<1x4x256xf32, #tpu.memory_space<vmem>>) attributes {dimension_semantics = [#tpu.dimension_semantics<parallel>, #tpu.dimension_semantics<parallel>], iteration_bounds = array<i64: 2, 1>, scalar_prefetch = 0 : i64, scratch_operands = 0 : i64, tpu.core_type = #tpu.core_type<tc>, window_params = [{transform_indices = @transform_0, window_bounds = array<i64: 1, 4, 256>}, {pipeline_mode = #tpu.pipeline_mode<synchronous>, transform_indices = @transform_1, window_bounds = array<i64: 4, 4>}, {pipeline_mode = #tpu.pipeline_mode<synchronous>, transform_indices = @transform_2, window_bounds = array<i64: 4, 1>}, {transform_indices = @transform_3, window_bounds = array<i64: 1, 4, 256>}]} {
    %c0 = arith.constant 0 : index
    %c0_0 = arith.constant 0 : index
    %c0_1 = arith.constant 0 : index
    %0 = vector.load %arg2[%c0, %c0_0, %c0_1] : memref<1x4x256xf32, #tpu.memory_space<vmem>>, vector<1x4x256xf32>
    %1 = vector.shape_cast %0 : vector<1x4x256xf32> to vector<4x256xf32>
    %2 = arith.mulf %1, %1 : vector<4x256xf32>
    %cst = arith.constant dense<0.000000e+00> : vector<256xf32>
    %3 = vector.multi_reduction <add>, %2, %cst [0] : vector<4x256xf32> to vector<256xf32>
    %4 = vector.shape_cast %3 : vector<256xf32> to vector<1x256xf32>
    %cst_2 = arith.constant 0.000000e+00 : f32
    %5 = vector.broadcast %cst_2 : f32 to vector<1x256xf32>
    %6 = arith.addf %4, %5 : vector<1x256xf32>
    %cst_3 = arith.constant 1.000000e-30 : f32
    %7 = vector.broadcast %cst_3 : f32 to vector<1x256xf32>
    %8 = arith.maximumf %6, %7 : vector<1x256xf32>
    %c0_4 = arith.constant 0 : index
    %c0_5 = arith.constant 0 : index
    %9 = vector.load %arg3[%c0_4, %c0_5] : memref<4x4xf32, #tpu.memory_space<vmem>>, vector<4x4xf32>
    %cst_6 = arith.constant dense<0.000000e+00> : vector<4x256xf32>
    %10 = tpu.matmul %9, %1, %cst_6 {dimension_numbers = #tpu.dot_dimension_numbers<[1], [0], [0], [1], [0, 0, 1, 1], [], []>} : vector<4x4xf32>, vector<4x256xf32>, vector<4x256xf32> -> vector<4x256xf32>
    %c0_7 = arith.constant 0 : index
    %c0_8 = arith.constant 0 : index
    %11 = vector.load %arg4[%c0_7, %c0_8] : memref<4x1xf32, #tpu.memory_space<vmem>>, vector<4x1xf32>
    %12 = vector.broadcast %11 : vector<4x1xf32> to vector<4x256xf32>
    %13 = arith.addf %10, %12 : vector<4x256xf32>
    %14 = arith.mulf %13, %13 : vector<4x256xf32>
    %15 = tpu.reciprocal %8 {approx = true} : vector<1x256xf32> -> vector<1x256xf32>
    %16 = vector.broadcast %15 : vector<1x256xf32> to vector<4x256xf32>
    %17 = arith.mulf %14, %16 : vector<4x256xf32>
    %c0_9 = arith.constant 0 : index
    %c0_10 = arith.constant 0 : index
    %c0_11 = arith.constant 0 : index
    %18 = vector.load %arg5[%c0_9, %c0_10, %c0_11] : memref<1x4x256xf32, #tpu.memory_space<vmem>>, vector<1x4x256xf32>
    %19 = vector.shape_cast %18 : vector<1x4x256xf32> to vector<4x256xf32>
    %20 = vector.shape_cast %17 : vector<4x256xf32> to vector<1x4x256xf32>
    tpu.vector_store %arg5[%c0_9, %c0_10, %c0_11], %20 {strides = array<i32>} : memref<1x4x256xf32, #tpu.memory_space<vmem>>, vector<1x4x256xf32>,
    return
  }
  func.func @transform_0(%arg0: i32, %arg1: i32) -> (i32, i32, i32) {
    %c0_i32 = arith.constant 0 : i32
    %c0_i32_0 = arith.constant 0 : i32
    return %arg0, %c0_i32, %arg1 : i32, i32, i32
  }
  func.func @transform_1(%arg0: i32, %arg1: i32) -> (i32, i32) {
    %c0_i32 = arith.constant 0 : i32
    %c0_i32_0 = arith.constant 0 : i32
    %c0_i32_1 = arith.constant 0 : i32
    return %c0_i32, %c0_i32_0 : i32, i32
  }
  func.func @transform_2(%arg0: i32, %arg1: i32) -> (i32, i32) {
    %c0_i32 = arith.constant 0 : i32
    %c0_i32_0 = arith.constant 0 : i32
    %c0_i32_1 = arith.constant 0 : i32
    return %c0_i32, %c0_i32_0 : i32, i32
  }
  func.func @transform_3(%arg0: i32, %arg1: i32) -> (i32, i32, i32) {
    %c0_i32 = arith.constant 0 : i32
    %c0_i32_0 = arith.constant 0 : i32
    return %arg0, %c0_i32, %arg1 : i32, i32, i32
  }
}

</mosaic_0001>

<llo_original>
// kernel: tpu_custom_call.1
$region0: #{tpu_custom_call.1}
  #allocation0 [shape = 'u32[]', space=smem, size = 0x4, offset = 0x4, fixed_abs, tag = 'smem constant byte address 0x4 - core index']
  #allocation1 [shape = 'u32[144,128]{1,0:T(1,128)}', space=vmem, size = 0x12000, scoped, tag = 'internal scratch']
  %s0 = inlined_call_operand.hbm [shape: f32[2,4,256], index: 0, kind: input, shape index: {}]
  %s1 = inlined_call_operand.vmem [shape: f32[4,4], index: 1, kind: input, shape index: {}]
  %s2 = inlined_call_operand.vmem [shape: f32[4,1], index: 2, kind: input, shape index: {}]
  %s3 = inlined_call_operand.hbm [shape: f32[2,4,256], index: 3, kind: output, shape index: {}]
  %s4 = sld [smem:[#allocation0]]
  $region49: #{tpu_custom_call.1} parent=0
    _
  %s6 = ssub.s32 1, %s4
  %s7 = scalar_select 0, %s6, %s4
  $region1: #{tpu_custom_call.1} parent=0
    #allocation2 [shape = 'u8[8192]{0}', space=vmem, size = 0x2000, scoped, tag = 'input window, operand 0']
    #allocation3 [shape = 's32[2]{0}', space=sflag, size = 0x8, scoped, tag = 'scoped memory for tpu_custom_call.1']
    #allocation4 [shape = 's32[2]{0}', space=sflag, size = 0x8, scoped, tag = 'scoped memory for tpu_custom_call.1']
    #allocation5 [shape = 'u8[8192]{0}', space=vmem, size = 0x2000, scoped, tag = 'output window, operand 0']
    %8 = vsyncpa [#allocation3], 0
    %s9 = scalar_lea.sflag [#allocation3], 1
    %10 = vsyncpa %s9, 0
    %11 = vsyncpa [#allocation4], 0
    %s12 = scalar_lea.sflag [#allocation4], 1
    %13 = vsyncpa %s12, 0
    loop: start=0, step=1, limit=4
    $region2: #{tpu_custom_call.1} parent=1 // loop_pre_header
      _
    $region3: #{tpu_custom_call.1} parent=1 // loop_header
      %s15 = sphi 0, %s19
      %p16 = scmp.ge.s32.totalorder %s15, 4
      %s22 = sphi 0, %s34
      %s23 = sphi 0, %s30
      %s24 = sphi 0, %s22
      %s25 = sphi 0, %s23
      %s26 = sphi 0, %s24
      %s27 = sphi 0, %s25
      %s39 = sphi 0, %s41
      %s42 = sphi 0, %s39
      %s43 = sphi 0, %s42
      %s59 = sphi 0, %s43
      %s63 = sphi 0, %s63
      %s65 = sphi 0, %s63
      %s66 = sphi 0, %s65
      %s80 = sphi 0, %s66
      %s84 = sphi 0, %s84
      %s86 = sphi 0, %s84
      %s87 = sphi 0, %s86
      %s101 = sphi 0, %s87
      %s109 = sphi 0, %s111
      %s112 = sphi 0, %s109
      %s113 = sphi 0, %s112
      %s129 = sphi 0, %s113
    $region4: #{tpu_custom_call.1} parent=1 // loop_header_branch
      %18 = sbr.rel (%p16) target = $region8
    $region5: #{tpu_custom_call.1} parent=1 // loop_body
      %s20 = ssub.s32 %s15, 1
      %s21 = ssub.s32 %s15, 2
      %s28 = sadd.s32 1, %s23
      %p29 = scmp.ge.s32.totalorder %s28, 1
      %s30 = scalar_select %p29, 0, %s28
      %s31 = sadd.s32 1, %s22
      %s32 = scalar_select %p29, %s31, %s22
      %p33 = scmp.ge.s32.totalorder %s32, 2
      %s34 = scalar_select %p33, 0, %s32
      %s35 = ssub.s32 %s22, %s34
      %s36 = ssub.s32 %s23, %s30
      %s37 = sor.u32 %s35, %s36
      %p38 = scmp.eq.s32.totalorder %s37, 0
      %s40 = sadd.s32 %s39, 1
      %s41 = scalar_select %p38, %s39, %s40
      %p44 = pneg %p38
      %p45 = scmp.eq.s32.totalorder %s15, 1
      %p46 = por %p44, %p45
      %p47 = scmp.ne.s32.totalorder %s39, %s42
      %p48 = scmp.eq.s32.totalorder %s15, 0
      %p49 = por %p47, %p48
      %p50 = scmp.ne.s32.totalorder %s39, %s42
      %p51 = scmp.eq.s32.totalorder %s20, 1
      %p52 = por %p50, %p51
      %p53 = scmp.ne.s32.totalorder %s42, %s43
      %p54 = scmp.eq.s32.totalorder %s20, 0
      %p55 = por %p53, %p54
      %p56 = scmp.ne.s32.totalorder %s42, %s43
      %p57 = scmp.eq.s32.totalorder %s21, 1
      %p58 = por %p56, %p57
      %p60 = scmp.ne.s32.totalorder %s43, %s59
      %p61 = scmp.eq.s32.totalorder %s21, 0
      %p62 = por %p60, %p61
      %s64 = sadd.s32 %s63, 1
      %p67 = scmp.eq.s32.totalorder %s15, 1
      %p68 = scmp.ne.s32.totalorder %s63, %s65
      %p69 = scmp.eq.s32.totalorder %s15, 0
      %p70 = por %p68, %p69
      %p71 = scmp.ne.s32.totalorder %s63, %s65
      %p72 = scmp.eq.s32.totalorder %s20, 1
      %p73 = por %p71, %p72
      %p74 = scmp.ne.s32.totalorder %s65, %s66
      %p75 = scmp.eq.s32.totalorder %s20, 0
      %p76 = por %p74, %p75
      %p77 = scmp.ne.s32.totalorder %s65, %s66
      %p78 = scmp.eq.s32.totalorder %s21, 1
      %p79 = por %p77, %p78
      %p81 = scmp.ne.s32.totalorder %s66, %s80
      %p82 = scmp.eq.s32.totalorder %s21, 0
      %p83 = por %p81, %p82
      %s85 = sadd.s32 %s84, 1
      %p88 = scmp.eq.s32.totalorder %s15, 1
      %p89 = scmp.ne.s32.totalorder %s84, %s86
      %p90 = scmp.eq.s32.totalorder %s15, 0
      %p91 = por %p89, %p90
      %p92 = scmp.ne.s32.totalorder %s84, %s86
      %p93 = scmp.eq.s32.totalorder %s20, 1
      %p94 = por %p92, %p93
      %p95 = scmp.ne.s32.totalorder %s86, %s87
      %p96 = scmp.eq.s32.totalorder %s20, 0
      %p97 = por %p95, %p96
      %p98 = scmp.ne.s32.totalorder %s86, %s87
      %p99 = scmp.eq.s32.totalorder %s21, 1
      %p100 = por %p98, %p99
      %p102 = scmp.ne.s32.totalorder %s87, %s101
      %p103 = scmp.eq.s32.totalorder %s21, 0
      %p104 = por %p102, %p103
      %s105 = ssub.s32 %s22, %s34
      %s106 = ssub.s32 %s23, %s30
      %s107 = sor.u32 %s105, %s106
      %p108 = scmp.eq.s32.totalorder %s107, 0
      %s110 = sadd.s32 %s109, 1
      %s111 = scalar_select %p108, %s109, %s110
      %p114 = pneg %p108
      %p115 = scmp.eq.s32.totalorder %s15, 1
      %p116 = por %p114, %p115
      %p117 = scmp.ne.s32.totalorder %s109, %s112
      %p118 = scmp.eq.s32.totalorder %s15, 0
      %p119 = por %p117, %p118
      %p120 = scmp.ne.s32.totalorder %s109, %s112
      %p121 = scmp.eq.s32.totalorder %s20, 1
      %p122 = por %p120, %p121
      %p123 = scmp.ne.s32.totalorder %s112, %s113
      %p124 = scmp.eq.s32.totalorder %s20, 0
      %p125 = por %p123, %p124
      %p126 = scmp.ne.s32.totalorder %s112, %s113
      %p127 = scmp.eq.s32.totalorder %s21, 1
      %p128 = por %p126, %p127
      %p130 = scmp.ne.s32.totalorder %s113, %s129
      %p131 = scmp.eq.s32.totalorder %s21, 0
      %p132 = por %p130, %p131
      %p133 = scmp.le.s32.totalorder 1, %s15
      %p134 = scmp.lt.s32.totalorder %s15, 3
      %p135 = pnand %p133, %p134
      %p136 = pneg %p135
      // Predicated region
      $region9: #{tpu_custom_call.1} parent=5 // pred_check
        _
      $region10: #{tpu_custom_call.1} parent=5 // pred_check_branch
        %138 = sbr.rel (%p135) target = $region12
      $region11: #{tpu_custom_call.1} parent=5 // pred_region
        %s139 = ssub.s32 %s15, 1
        // Predicated region
        $region13: #{tpu_custom_call.1} parent=11 // pred_check
          %p140 = pneg %p76
        $region14: #{tpu_custom_call.1} parent=11 // pred_check_branch
          %142 = sbr.rel (%p140) target = $region16
        $region15: #{tpu_custom_call.1} parent=11 // pred_region
          _
        $region16: #{tpu_custom_call.1} parent=11 // pred_fallthru
          _
        // Predicated region
        $region17: #{tpu_custom_call.1} parent=11 // pred_check
          %p143 = pneg %p97
        $region18: #{tpu_custom_call.1} parent=11 // pred_check_branch
          %145 = sbr.rel (%p143) target = $region20
        $region19: #{tpu_custom_call.1} parent=11 // pred_region
          _
        $region20: #{tpu_custom_call.1} parent=11 // pred_fallthru
          _
      $region12: #{tpu_custom_call.1} parent=5 // pred_fallthru
        _
      %p146 = scmp.lt.s32.totalorder %s15, 2
      // Predicated region
      $region21: #{tpu_custom_call.1} parent=5 // pred_check
        %p147 = pneg %p146
      $region22: #{tpu_custom_call.1} parent=5 // pred_check_branch
        %149 = sbr.rel (%p147) target = $region24
      $region23: #{tpu_custom_call.1} parent=5 // pred_region
        // Predicated region
        $region25: #{tpu_custom_call.1} parent=23 // pred_check
          %p150 = pneg %p49
        $region26: #{tpu_custom_call.1} parent=23 // pred_check_branch
          %152 = sbr.rel (%p150) target = $region28
        $region27: #{tpu_custom_call.1} parent=23 // pred_region
          %s153 = sand.u32 %s39, 1
          %s154 = scalar_lea.sflag [#allocation3], %s153
          %s155 = sand.u32 %s39, 1
          %s156 = smul.addr %s155, 8
          %s157 = scalar_lea.vmem [#allocation2], %s156
          %s158 = smul.u32 2, %s23
          %s160 = ssub.s32 128, 128
          %161 = vsyncadd %s154, %s160
          %s162 = smul.addr %s22, 2
          %s163 = sadd.s32 %s158, %s162
          %s164 = smul.addr %s163, 64
          %s165 = scalar_lea.hbm %s0, %s164
          %s167 = sshll.u32 %s157, 4
          %s168 = int_to_ptr.vmem [resolvable:$true] %s167
          %170 = dma.hbm_to_vmem [thread:$0]  %s165, 128, %s168, %s154
        $region28: #{tpu_custom_call.1} parent=23 // pred_fallthru
          _
      $region24: #{tpu_custom_call.1} parent=5 // pred_fallthru
        _
      %p171 = scmp.le.s32.totalorder 1, %s15
      %p172 = scmp.lt.s32.totalorder %s15, 3
      %p173 = pnand %p171, %p172
      %p174 = pneg %p173
      // Predicated region
      $region29: #{tpu_custom_call.1} parent=5 // pred_check
        _
      $region30: #{tpu_custom_call.1} parent=5 // pred_check_branch
        %176 = sbr.rel (%p173) target = $region32
      $region31: #{tpu_custom_call.1} parent=5 // pred_region
        %s177 = ssub.s32 %s15, 1
        %s178 = sand.u32 %s42, 1
        %s179 = scalar_lea.sflag [#allocation3], %s178
        %s180 = sand.u32 %s42, 1
        %s181 = smul.addr %s180, 8
        %s182 = scalar_lea.vmem [#allocation2], %s181
        // Predicated region
        $region33: #{tpu_custom_call.1} parent=31 // pred_check
          %p183 = pneg %p55
        $region34: #{tpu_custom_call.1} parent=31 // pred_check_branch
          %185 = sbr.rel (%p183) target = $region36
        $region35: #{tpu_custom_call.1} parent=31 // pred_region
          %186 = dma.done %s179, 128
        $region36: #{tpu_custom_call.1} parent=31 // pred_fallthru
          _
        %s187 = sand.u32 %s42, 1
        %s188 = scalar_lea.sflag [#allocation3], %s187
        %s189 = sand.u32 %s42, 1
        %s190 = smul.addr %s189, 8
        %s191 = scalar_lea.vmem [#allocation2], %s190
        %p192 = pneg %p55
        %p193 = pneg %p52
        %p194 = pneg %p76
        %p195 = pneg %p73
        %p196 = pneg %p97
        %p197 = pneg %p94
        %p198 = pneg %p125
        %p199 = pneg %p122
        %s200 = sand.u32 %s112, 1
        %s201 = scalar_lea.sflag [#allocation4], %s200
        %s202 = sand.u32 %s112, 1
        %s203 = smul.addr %s202, 8
        %s204 = scalar_lea.vmem [#allocation5], %s203
        %s205 = smul.u32 2, %s25
        %s206 = smul.u32 2, %s25
        %v207 = vld [vmem:[%s182] sm:$0xff]
        %v208 = vmul.f32 %v207, %v207
        %v210 = vcombine.high %v208, %v208
        %vm212 = vcmask 1043456
        %v213 = vsel %vm212, %v208, 0.0
        %v214 = vrot.slane %v213, 4
        %v215 = vadd.f32 %v213, %v214
        %v216 = vrot.slane %v215, 2
        %v217 = vadd.f32 %v215, %v216
        %v218 = vrot.slane %v217, 1
        %v219 = vadd.f32 %v217, %v218
        %v220 = vsel %vm212, %v210, 0.0
        %v221 = vrot.slane %v220, 4
        %v222 = vadd.f32 %v220, %v221
        %v223 = vrot.slane %v222, 2
        %v224 = vadd.f32 %v222, %v223
        %v225 = vrot.slane %v224, 1
        %v226 = vadd.f32 %v224, %v225
        %v227 = vadd.f32 %v219, 0.0
        %v228 = vadd.f32 %v226, 0.0
        %v229 = vmax.f32 %v227, 1e-30
        %v230 = vmax.f32 %v228, 1e-30
        %v231 = vld [vmem:[%s1] sm:$0xf]
        %v232 = vld [vmem:[%s2] sm:$0xf]
        %234 = vset.pattern.permute.xlu0 0
        %235 = vperm.xlu0 %234, %v232
        %v236 = vpop.permute.xlu0 %235
        %v239 = vcombine.high %v207, %v207
        %vm240 = vcmask 31744
        %v242 = vsel %vm240, %v231, 0
        %v244 = vsel %vm212, %v207, 0
        %v246 = vsel %vm212, %v239, 0
        %248 = vmatprep.subr.mxu0 %v246
        %249 = vmatpush1.msra.mxu0 %v244
        %250 = vmatprep.subr.mxu0 0.0
        %251 = vmatpush1.msra.mxu0 0.0
        %252 = vmatprep.subr.mxu0 0.0
        %253 = vmatpush1.msra.mxu0 0.0
        %254 = vmatprep.subr.mxu0 0.0
        %255 = vmatpush1.msra.mxu0 0.0
        %256 = vmatprep.subr.mxu0 0.0
        %257 = vmatpush1.msra.mxu0 0.0
        %258 = vmatprep.subr.mxu0 0.0
        %259 = vmatpush1.msra.mxu0 0.0
        %260 = vmatprep.subr.mxu0 0.0
        %261 = vmatpush1.msra.mxu0 0.0
        %262 = vmatprep.subr.mxu0 0.0
        %263 = vmatpush1.msra.mxu0 0.0
        %264 = vmatprep.subr.mxu0 0.0
        %265 = vmatpush1.msra.mxu0 0.0
        %266 = vmatprep.subr.mxu0 0.0
        %267 = vmatpush1.msra.mxu0 0.0
        %268 = vmatprep.subr.mxu0 0.0
        %269 = vmatpush1.msra.mxu0 0.0
        %270 = vmatprep.subr.mxu0 0.0
        %271 = vmatpush1.msra.mxu0 0.0
        %272 = vmatprep.subr.mxu0 0.0
        %273 = vmatpush1.msra.mxu0 0.0
        %274 = vmatprep.subr.mxu0 0.0
        %275 = vmatpush1.msra.mxu0 0.0
        %276 = vmatprep.subr.mxu0 0.0
        %277 = vmatpush1.msra.mxu0 0.0
        %278 = vmatprep.subr.mxu0 0.0
        %279 = vmatpush1.msra.mxu0 0.0
        %280 = vmatprep.subr.mxu0 0.0
        %281 = vmatpush1.msra.mxu0 0.0
        %282 = vmatprep.subr.mxu0 0.0
        %283 = vmatpush1.msra.mxu0 0.0
        %284 = vmatprep.subr.mxu0 0.0
        %285 = vmatpush1.msra.mxu0 0.0
        %286 = vmatprep.subr.mxu0 0.0
        %287 = vmatpush1.msra.mxu0 0.0
        %288 = vmatprep.subr.mxu0 0.0
        %289 = vmatpush1.msra.mxu0 0.0
        %290 = vmatprep.subr.mxu0 0.0
        %291 = vmatpush1.msra.mxu0 0.0
        %292 = vmatprep.subr.mxu0 0.0
        %293 = vmatpush1.msra.mxu0 0.0
        %294 = vmatprep.subr.mxu0 0.0
        %295 = vmatpush1.msra.mxu0 0.0
        %296 = vmatprep.subr.mxu0 0.0
        %297 = vmatpush1.msra.mxu0 0.0
        %298 = vmatprep.subr.mxu0 0.0
        %299 = vmatpush1.msra.mxu0 0.0
        %300 = vmatprep.subr.mxu0 0.0
        %301 = vmatpush1.msra.mxu0 0.0
        %302 = vmatprep.subr.mxu0 0.0
        %303 = vmatpush1.msra.mxu0 0.0
        %304 = vmatprep.subr.mxu0 0.0
        %305 = vmatpush1.msra.mxu0 0.0
        %306 = vmatprep.subr.mxu0 0.0
        %307 = vmatpush1.msra.mxu0 0.0
        %308 = vmatprep.subr.mxu0 0.0
        %309 = vmatpush1.msra.mxu0 0.0
        %310 = vmatprep.subr.mxu0 0.0
        %311 = vmatpush1.msra.mxu0 0.0
        %312 = vmatprep.mubr.f32.mxu0 0.0
        %313 = vmatmul.mubr.f32.gmra.mrb[0].mxu0 %v242
        %v314 = vpop.f32.mrb[0].mxu0
        %v315 = vadd.f32 %v236, %v314
        %v316 = vpop.f32.mrb[0].mxu0
        %v317 = vadd.f32 %v236, %v316
        %318 = vdwg.mxu0
        %v319 = vmul.f32 %v315, %v315
        %v320 = vmul.f32 %v317, %v317
        %v321 = vrcp.pop %v229
        %v322 = vrcp.pop %v230
        %v323 = vmul.f32 %v319, %v321
        %v324 = vmul.f32 %v320, %v322
        %v327 = vcombine.low %v323, %v324
        %329 = vst [vmem:[%s204] sm:$0xff] %v327
        %s330 = sand.u32 %s112, 1
        %s331 = scalar_lea.sflag [#allocation4], %s330
        %s332 = sand.u32 %s112, 1
        %s333 = smul.addr %s332, 8
        %s334 = scalar_lea.vmem [#allocation5], %s333
        // Predicated region
        $region37: #{tpu_custom_call.1} parent=31 // pred_check
          %p335 = pneg %p122
        $region38: #{tpu_custom_call.1} parent=31 // pred_check_branch
          %337 = sbr.rel (%p335) target = $region40
        $region39: #{tpu_custom_call.1} parent=31 // pred_region
          %s338 = smul.u32 2, %s25
          %s340 = ssub.s32 128, 128
          %341 = vsyncadd %s331, %s340
          %s342 = smul.addr %s24, 2
          %s343 = sadd.s32 %s338, %s342
          %s344 = smul.addr %s343, 64
          %s345 = scalar_lea.hbm %s3, %s344
          %s347 = sshll.u32 %s334, 4
          %s348 = int_to_ptr.vmem [resolvable:$true] %s347
          %350 = dma.vmem_to_hbm [thread:$0]  %s348, 128, %s345, %s331
        $region40: #{tpu_custom_call.1} parent=31 // pred_fallthru
          _
      $region32: #{tpu_custom_call.1} parent=5 // pred_fallthru
        _
      %p351 = scmp.le.s32.totalorder 2, %s15
      // Predicated region
      $region41: #{tpu_custom_call.1} parent=5 // pred_check
        %p352 = pneg %p351
      $region42: #{tpu_custom_call.1} parent=5 // pred_check_branch
        %354 = sbr.rel (%p352) target = $region44
      $region43: #{tpu_custom_call.1} parent=5 // pred_region
        %s355 = ssub.s32 %s15, 2
        // Predicated region
        $region45: #{tpu_custom_call.1} parent=43 // pred_check
          %p356 = pneg %p128
        $region46: #{tpu_custom_call.1} parent=43 // pred_check_branch
          %358 = sbr.rel (%p356) target = $region48
        $region47: #{tpu_custom_call.1} parent=43 // pred_region
          %s359 = sand.u32 %s113, 1
          %s360 = scalar_lea.sflag [#allocation4], %s359
          %s361 = sand.u32 %s113, 1
          %s362 = smul.addr %s361, 8
          %s363 = scalar_lea.vmem [#allocation5], %s362
          %364 = dma.done %s360, 128
        $region48: #{tpu_custom_call.1} parent=43 // pred_fallthru
          _
      $region44: #{tpu_custom_call.1} parent=5 // pred_fallthru
        _
    $region6: #{tpu_custom_call.1} parent=1 // loop_footer
      %s19 = sadd.s32 1, %s15
    $region7: #{tpu_custom_call.1} parent=1 // loop_footer_branch
      %14 = sbr.rel target = $region3
    $region8: #{tpu_custom_call.1} parent=1 // loop_exit
      _
    %365 = vsyncpa [#allocation3], 1
    %s366 = scalar_lea.sflag [#allocation3], 1
    %367 = vsyncpa %s366, 1
    %368 = vsyncpa [#allocation4], 1
    %s369 = scalar_lea.sflag [#allocation4], 1
    %370 = vsyncpa %s369, 1

</llo_original>
